<compile_context>
chip_gen: v7x
topology: tpu7x:2x2x1
jax: 0.10.0
libtpu: 0.0.40
codegen_flags: <defaults>
</compile_context>

<pallas_src>
from functools import partial

import jax
import jax.numpy as jnp
from jax.experimental import pallas as pl
from jax.experimental.pallas import tpu as pltpu


def _affine_net2d_kernel(xt_ref, w1_ref, b1_ref, b2_ref, w2stk_ref, w3aug_ref,
                         out_ref, a_buf, b_buf):
    n_h1 = w1_ref.shape[0]
    n_h2 = b2_ref.shape[0]
    tile = xt_ref.shape[1]

    xt = xt_ref[...]                       # (2, T)  feature-major batch tile
    x1 = xt[0:1, :]                        # (1, T)
    x2 = xt[1:2, :]
    w1 = w1_ref[...]                       # (n_h1, 2)

    # ---- layer 1: contraction depth 2 -> two broadcast FMAs on the VPU ----
    h1 = w1[:, 0:1] * x1 + w1[:, 1:2] * x2 + b1_ref[...]          # (n_h1, T)
    z1 = jnp.tanh(h1)

    # stacked operand [z1 ; s1]   (s1 = sech^2(h1) = 1 - tanh^2, reuses z1)
    a_buf[0:n_h1, :] = z1
    a_buf[n_h1:, :] = 1.0 - z1 * z1

    # ---- fused layer 2: one MXU matmul gives h2_pre, t1, t2 ----
    # w2stk = [[w2, 0], [0, w2*w1[:,0]], [0, w2*w1[:,1]]]
    r = jnp.dot(w2stk_ref[...], a_buf[...],
                preferred_element_type=jnp.float32)               # (3*n_h2, T)
    z2 = jnp.tanh(r[0:n_h2, :] + b2_ref[...])
    s2 = 1.0 - z2 * z2

    # stacked operand [z2 ; u1 ; u2 ; x1 ; x2 ; 1 ; 0...] for the final matmul
    b_buf[0:n_h2, :] = z2
    b_buf[n_h2:2 * n_h2, :] = s2 * r[n_h2:2 * n_h2, :]            # u1
    b_buf[2 * n_h2:3 * n_h2, :] = s2 * r[2 * n_h2:3 * n_h2, :]    # u2
    ridx = jax.lax.broadcasted_iota(jnp.int32, (8, tile), 0)
    b_buf[3 * n_h2:, :] = jnp.where(
        ridx == 0, x1,
        jnp.where(ridx == 1, x2,
                  jnp.where(ridx == 2, 1.0, 0.0)))

    # ---- final fused matmul: rows = [y ; v1 ; v2 ; pad], epilogue folded
    # into W3aug (b3 via the "ones" row, c0*x1 / c1*x2 via the x rows).
    # Single aligned full-block store of the lane-dense output slab.
    out_ref[...] = jnp.dot(w3aug_ref[...], b_buf[...],
                           preferred_element_type=jnp.float32
                           ).astype(out_ref.dtype)


def _round_up(a, b):
    return ((a + b - 1) // b) * b


@partial(jax.jit, static_argnums=(2, 3))
def _affine_net2d_call(x, params, tile, padded):
    w1, b1, w2, b2, w3, b3, c = params
    f32 = jnp.float32
    w1 = w1.astype(f32); b1 = b1.astype(f32)
    w2 = w2.astype(f32); b2 = b2.astype(f32)
    w3 = w3.astype(f32); b3 = b3.astype(f32)
    c = c.astype(f32)

    nx, n_in = x.shape
    n_h1 = w1.shape[0]
    n_h2 = w2.shape[0]
    n_o = w3.shape[0]

    # ---- grid-invariant weight folds (built once, outside the kernel) ----
    # layer-2 block weight: [z1 ; s1] -> [h2_pre ; t1 ; t2]
    w2a = w2 * w1[:, 0][None, :]           # folds dh1dx1 into w2
    w2b = w2 * w1[:, 1][None, :]           # folds dh1dx2 into w2
    zer = jnp.zeros_like(w2)
    w2stk = jnp.concatenate([
        jnp.concatenate([w2, zer], axis=1),
        jnp.concatenate([zer, w2a], axis=1),
        jnp.concatenate([zer, w2b], axis=1)], axis=0)      # (3*n_h2, 2*n_h1)

    # final block weight incl. epilogue: [z2; u1; u2; x1; x2; 1; 0..] ->
    #   rows 0:n_o       y  =  w3 @ z2 + b3
    #   rows n_o:2n_o    v1 =  w3 @ u2 + c0 * x1      (dydx2 = w3 @ u2)
    #   rows 2n_o:3n_o   v2 = -w3 @ u1 + c1 * x2      (dydx1 = w3 @ u1)
    rows = _round_up(3 * n_o, 8)           # pad output rows to sublane multiple
    ka = 3 * n_h2 + 8                      # operand rows (aug block padded to 8)
    w3aug = jnp.zeros((rows, ka), f32)
    w3aug = w3aug.at[0:n_o, 0:n_h2].set(w3)
    w3aug = w3aug.at[0:n_o, 3 * n_h2 + 2].set(b3)
    w3aug = w3aug.at[n_o:2 * n_o, 2 * n_h2:3 * n_h2].set(w3)
    w3aug = w3aug.at[n_o:2 * n_o, 3 * n_h2 + 0].set(c[0, 0])
    w3aug = w3aug.at[2 * n_o:3 * n_o, n_h2:2 * n_h2].set(-w3)
    w3aug = w3aug.at[2 * n_o:3 * n_o, 3 * n_h2 + 1].set(c[1, 0])

    # feature-major input so the batch sits on the 128-lane axis
    xt = x.T.astype(f32)                                    # (2, nx)
    if padded != nx:
        xt = jnp.pad(xt, ((0, 0), (0, padded - nx)))        # (2, padded)

    full = lambda i: (0, 0)
    out = pl.pallas_call(
        _affine_net2d_kernel,
        out_shape=jax.ShapeDtypeStruct((rows, padded), f32),
        grid=(padded // tile,),
        in_specs=[
            pl.BlockSpec((n_in, tile), lambda i: (0, i)),   # x (feature-major)
            pl.BlockSpec((n_h1, n_in), full),               # w1
            pl.BlockSpec((n_h1, 1), full),                  # b1
            pl.BlockSpec((n_h2, 1), full),                  # b2
            pl.BlockSpec((3 * n_h2, 2 * n_h1), full),       # fused layer-2 weight
            pl.BlockSpec((rows, ka), full),                 # fused final weight
        ],
        out_specs=pl.BlockSpec((rows, tile), lambda i: (0, i)),
        scratch_shapes=[
            pltpu.VMEM((2 * n_h1, tile), f32),              # [z1 ; s1]
            pltpu.VMEM((3 * n_h2 + 8, tile), f32),          # [z2 ; u1 ; u2 ; aug]
        ],
        compiler_params=pltpu.CompilerParams(
            dimension_semantics=("parallel",),
            vmem_limit_bytes=48 * 1024 * 1024,
        ),
    )(xt, w1, b1[:, None], b2[:, None], w2stk, w3aug)

    # single transpose pass, then cheap column slices (batch-major outputs)
    out_t = out[:, :nx].T                                   # (nx, rows)
    y = out_t[:, 0:n_o]
    v1 = out_t[:, n_o:2 * n_o]
    v2 = out_t[:, 2 * n_o:3 * n_o]
    return y, v1, v2


def affine_net2d(x, params, *, tile_nx=8192):
    """Pallas wrapper. x: (nx, 2); returns (y, v1, v2), each (nx, n_o)."""
    nx, n_in = x.shape
    assert n_in == 2, "AffineNet2D Jacobian path is defined for n_in == 2"

    # batch tile lives on the 128-lane axis: force a 128-multiple tile
    tile_nx = max(128, (int(tile_nx) // 128) * 128)
    tile = min(tile_nx, _round_up(nx, 128))
    # split into >= 2 grid steps when the batch allows it (v7x megacore) and
    # avoid a mostly-padding trailing step for medium nx.
    half = _round_up(nx, 256) // 2
    if half >= 128:
        tile = min(tile, half)
    padded = _round_up(nx, tile)
    return _affine_net2d_call(x, params, tile, padded)


def init_params(key, n_in, n_h1, n_h2, n_o):
    """Deterministic PyTorch-Linear-style init (uniform +/- 1/sqrt(fan_in))."""
    ks = jax.random.split(key, 6)

    def lin(kw, kb, fan_in, fan_out):
        bound = 1.0 / float(fan_in) ** 0.5
        w = jax.random.uniform(kw, (fan_out, fan_in), jnp.float32, -bound, bound)
        b = jax.random.uniform(kb, (fan_out,), jnp.float32, -bound, bound)
        return w, b

    w1, b1 = lin(ks[0], ks[1], n_in, n_h1)
    w2, b2 = lin(ks[2], ks[3], n_h1, n_h2)
    w3, b3 = lin(ks[4], ks[5], n_h2, n_o)
    c = jnp.array([[2.0], [-0.5]], jnp.float32)   # matches self.c in __init__
    return (w1, b1, w2, b2, w3, b3, c)


def reference(x, params):
    """Pure-JAX transcription of the torch forward, for correctness check."""
    w1, b1, w2, b2, w3, b3, c = params
    h1 = x @ w1.T + b1
    z1 = jnp.tanh(h1)
    h2 = z1 @ w2.T + b2
    z2 = jnp.tanh(h2)
    y = z2 @ w3.T + b3
    nx = x.shape[0]
    dh1dx1 = jnp.repeat(w1[:, 0:1], nx, axis=1)
    dh1dx2 = jnp.repeat(w1[:, 1:2], nx, axis=1)
    dz1dh1 = 4.0 / (jnp.exp(-h1.T) + jnp.exp(h1.T)) ** 2
    dz2dh2 = 4.0 / (jnp.exp(-h2.T) + jnp.exp(h2.T)) ** 2
    dydx1 = (w3 @ (dz2dh2 * (w2 @ (dz1dh1 * dh1dx1)))).T
    dydx2 = (w3 @ (dz2dh2 * (w2 @ (dz1dh1 * dh1dx2)))).T
    v1 = dydx2 + c[0] * x[:, 0:1]
    v2 = -dydx1 + c[1] * x[:, 1:2]
    return y, v1, v2


if __name__ == "__main__":
    nx, n_in, n_h1, n_h2, n_o = 200, 2, 32, 32, 4
    key = jax.random.PRNGKey(0)
    kx, kp = jax.random.split(key)
    x = jax.random.normal(kx, (nx, n_in), jnp.float32)
    params = init_params(kp, n_in, n_h1, n_h2, n_o)

    # nx=200 -> tile=128, 2-step grid: exercises the multi-step + padding path
    y, v1, v2 = affine_net2d(x, params)
    jax.block_until_ready((y, v1, v2))

    y_r, v1_r, v2_r = reference(x, params)
    assert jnp.allclose(y, y_r, atol=1e-4), "y mismatch"
    assert jnp.allclose(v1, v1_r, atol=1e-4), "v1 mismatch"
    assert jnp.allclose(v2, v2_r, atol=1e-4), "v2 mismatch"
    print("KERNEL_OK")
</pallas_src>

<mosaic_0001>
module attributes {stable_mosaic.version = 11 : i64} {
  func.func @_affine_net2d_kernel(%arg0: i32, %arg1: memref<2x128xf32, #tpu.memory_space<vmem>>, %arg2: memref<32x2xf32, #tpu.memory_space<vmem>>, %arg3: memref<32x1xf32, #tpu.memory_space<vmem>>, %arg4: memref<32x1xf32, #tpu.memory_space<vmem>>, %arg5: memref<96x64xf32, #tpu.memory_space<vmem>>, %arg6: memref<16x104xf32, #tpu.memory_space<vmem>>, %arg7: memref<16x128xf32, #tpu.memory_space<vmem>>, %arg8: memref<64x128xf32, #tpu.memory_space<vmem>>, %arg9: memref<104x128xf32, #tpu.memory_space<vmem>>) attributes {dimension_semantics = [#tpu.dimension_semantics<parallel>], iteration_bounds = array<i64: 2>, scalar_prefetch = 0 : i64, scratch_operands = 2 : i64, tpu.core_type = #tpu.core_type<tc>, window_params = [{transform_indices = @transform_0, window_bounds = array<i64: 2, 128>}, {pipeline_mode = #tpu.pipeline_mode<synchronous>, transform_indices = @transform_1, window_bounds = array<i64: 32, 2>}, {pipeline_mode = #tpu.pipeline_mode<synchronous>, transform_indices = @transform_2, window_bounds = array<i64: 32, 1>}, {pipeline_mode = #tpu.pipeline_mode<synchronous>, transform_indices = @transform_3, window_bounds = array<i64: 32, 1>}, {pipeline_mode = #tpu.pipeline_mode<synchronous>, transform_indices = @transform_4, window_bounds = array<i64: 96, 64>}, {pipeline_mode = #tpu.pipeline_mode<synchronous>, transform_indices = @transform_5, window_bounds = array<i64: 16, 104>}, {transform_indices = @transform_6, window_bounds = array<i64: 16, 128>}]} {
    %c0 = arith.constant 0 : index
    %c0_0 = arith.constant 0 : index
    %0 = vector.load %arg1[%c0, %c0_0] : memref<2x128xf32, #tpu.memory_space<vmem>>, vector<2x128xf32>
    %1 = vector.extract_strided_slice %0 {offsets = [0, 0], sizes = [1, 128], strides = [1, 1]} : vector<2x128xf32> to vector<1x128xf32>
    %2 = vector.extract_strided_slice %0 {offsets = [1, 0], sizes = [1, 128], strides = [1, 1]} : vector<2x128xf32> to vector<1x128xf32>
    %c0_1 = arith.constant 0 : index
    %c0_2 = arith.constant 0 : index
    %3 = vector.load %arg2[%c0_1, %c0_2] : memref<32x2xf32, #tpu.memory_space<vmem>>, vector<32x2xf32>
    %4 = vector.extract_strided_slice %3 {offsets = [0, 0], sizes = [32, 1], strides = [1, 1]} : vector<32x2xf32> to vector<32x1xf32>
    %5 = vector.broadcast %4 : vector<32x1xf32> to vector<32x128xf32>
    %6 = vector.broadcast %1 : vector<1x128xf32> to vector<32x128xf32>
    %7 = arith.mulf %5, %6 : vector<32x128xf32>
    %8 = vector.extract_strided_slice %3 {offsets = [0, 1], sizes = [32, 1], strides = [1, 1]} : vector<32x2xf32> to vector<32x1xf32>
    %9 = vector.broadcast %8 : vector<32x1xf32> to vector<32x128xf32>
    %10 = vector.broadcast %2 : vector<1x128xf32> to vector<32x128xf32>
    %11 = arith.mulf %9, %10 : vector<32x128xf32>
    %12 = arith.addf %7, %11 : vector<32x128xf32>
    %c0_3 = arith.constant 0 : index
    %c0_4 = arith.constant 0 : index
    %13 = vector.load %arg3[%c0_3, %c0_4] : memref<32x1xf32, #tpu.memory_space<vmem>>, vector<32x1xf32>
    %14 = vector.broadcast %13 : vector<32x1xf32> to vector<32x128xf32>
    %15 = arith.addf %12, %14 : vector<32x128xf32>
    %16 = math.tanh %15 : vector<32x128xf32>
    %c0_5 = arith.constant 0 : index
    %c0_6 = arith.constant 0 : index
    %17 = vector.load %arg8[%c0_5, %c0_6] : memref<64x128xf32, #tpu.memory_space<vmem>>, vector<32x128xf32>
    tpu.vector_store %arg8[%c0_5, %c0_6], %16 {strides = array<i32>} : memref<64x128xf32, #tpu.memory_space<vmem>>, vector<32x128xf32>,
    %18 = arith.mulf %16, %16 : vector<32x128xf32>
    %cst = arith.constant 1.000000e+00 : f32
    %19 = vector.broadcast %cst : f32 to vector<32x128xf32>
    %20 = arith.subf %19, %18 : vector<32x128xf32>
    %c32 = arith.constant 32 : index
    %c0_7 = arith.constant 0 : index
    %21 = vector.load %arg8[%c32, %c0_7] : memref<64x128xf32, #tpu.memory_space<vmem>>, vector<32x128xf32>
    tpu.vector_store %arg8[%c32, %c0_7], %20 {strides = array<i32>} : memref<64x128xf32, #tpu.memory_space<vmem>>, vector<32x128xf32>,
    %c0_8 = arith.constant 0 : index
    %c0_9 = arith.constant 0 : index
    %22 = vector.load %arg5[%c0_8, %c0_9] : memref<96x64xf32, #tpu.memory_space<vmem>>, vector<96x64xf32>
    %c0_10 = arith.constant 0 : index
    %c0_11 = arith.constant 0 : index
    %23 = vector.load %arg8[%c0_10, %c0_11] : memref<64x128xf32, #tpu.memory_space<vmem>>, vector<64x128xf32>
    %cst_12 = arith.constant dense<0.000000e+00> : vector<96x128xf32>
    %24 = tpu.matmul %22, %23, %cst_12 {dimension_numbers = #tpu.dot_dimension_numbers<[1], [0], [0], [1], [0, 0, 1, 1], [], []>} : vector<96x64xf32>, vector<64x128xf32>, vector<96x128xf32> -> vector<96x128xf32>
    %25 = vector.extract_strided_slice %24 {offsets = [0, 0], sizes = [32, 128], strides = [1, 1]} : vector<96x128xf32> to vector<32x128xf32>
    %c0_13 = arith.constant 0 : index
    %c0_14 = arith.constant 0 : index
    %26 = vector.load %arg4[%c0_13, %c0_14] : memref<32x1xf32, #tpu.memory_space<vmem>>, vector<32x1xf32>
    %27 = vector.broadcast %26 : vector<32x1xf32> to vector<32x128xf32>
    %28 = arith.addf %25, %27 : vector<32x128xf32>
    %29 = math.tanh %28 : vector<32x128xf32>
    %30 = arith.mulf %29, %29 : vector<32x128xf32>
    %cst_15 = arith.constant 1.000000e+00 : f32
    %31 = vector.broadcast %cst_15 : f32 to vector<32x128xf32>
    %32 = arith.subf %31, %30 : vector<32x128xf32>
    %c0_16 = arith.constant 0 : index
    %c0_17 = arith.constant 0 : index
    %33 = vector.load %arg9[%c0_16, %c0_17] : memref<104x128xf32, #tpu.memory_space<vmem>>, vector<32x128xf32>
    tpu.vector_store %arg9[%c0_16, %c0_17], %29 {strides = array<i32>} : memref<104x128xf32, #tpu.memory_space<vmem>>, vector<32x128xf32>,
    %34 = vector.extract_strided_slice %24 {offsets = [32, 0], sizes = [32, 128], strides = [1, 1]} : vector<96x128xf32> to vector<32x128xf32>
    %35 = arith.mulf %32, %34 : vector<32x128xf32>
    %c32_18 = arith.constant 32 : index
    %c0_19 = arith.constant 0 : index
    %36 = vector.load %arg9[%c32_18, %c0_19] : memref<104x128xf32, #tpu.memory_space<vmem>>, vector<32x128xf32>
    tpu.vector_store %arg9[%c32_18, %c0_19], %35 {strides = array<i32>} : memref<104x128xf32, #tpu.memory_space<vmem>>, vector<32x128xf32>,
    %37 = vector.extract_strided_slice %24 {offsets = [64, 0], sizes = [32, 128], strides = [1, 1]} : vector<96x128xf32> to vector<32x128xf32>
    %38 = arith.mulf %32, %37 : vector<32x128xf32>
    %c64 = arith.constant 64 : index
    %c0_20 = arith.constant 0 : index
    %39 = vector.load %arg9[%c64, %c0_20] : memref<104x128xf32, #tpu.memory_space<vmem>>, vector<32x128xf32>
    tpu.vector_store %arg9[%c64, %c0_20], %38 {strides = array<i32>} : memref<104x128xf32, #tpu.memory_space<vmem>>, vector<32x128xf32>,
    %40 = tpu.iota {dimensions = array<i32: 0>} : vector<8x128xi32>
    %c0_i32 = arith.constant 0 : i32
    %41 = vector.broadcast %c0_i32 : i32 to vector<8x128xi32>
    %42 = arith.cmpi eq, %40, %41 : vector<8x128xi32>
    %c1_i32 = arith.constant 1 : i32
    %43 = vector.broadcast %c1_i32 : i32 to vector<8x128xi32>
    %44 = arith.cmpi eq, %40, %43 : vector<8x128xi32>
    %c2_i32 = arith.constant 2 : i32
    %45 = vector.broadcast %c2_i32 : i32 to vector<8x128xi32>
    %46 = arith.cmpi eq, %40, %45 : vector<8x128xi32>
    %cst_21 = arith.constant 1.000000e+00 : f32
    %cst_22 = arith.constant 0.000000e+00 : f32
    %47 = vector.broadcast %cst_21 : f32 to vector<8x128xf32>
    %48 = vector.broadcast %cst_22 : f32 to vector<8x128xf32>
    %49 = arith.select %46, %47, %48 : vector<8x128xi1>, vector<8x128xf32>
    %50 = vector.shape_cast %2 : vector<1x128xf32> to vector<1x128xf32>
    %51 = vector.broadcast %50 : vector<1x128xf32> to vector<8x128xf32>
    %52 = arith.select %44, %51, %49 : vector<8x128xi1>, vector<8x128xf32>
    %53 = vector.shape_cast %1 : vector<1x128xf32> to vector<1x128xf32>
    %54 = vector.broadcast %53 : vector<1x128xf32> to vector<8x128xf32>
    %55 = arith.select %42, %54, %52 : vector<8x128xi1>, vector<8x128xf32>
    %c96 = arith.constant 96 : index
    %c0_23 = arith.constant 0 : index
    %56 = vector.load %arg9[%c96, %c0_23] : memref<104x128xf32, #tpu.memory_space<vmem>>, vector<8x128xf32>
    tpu.vector_store %arg9[%c96, %c0_23], %55 {strides = array<i32>} : memref<104x128xf32, #tpu.memory_space<vmem>>, vector<8x128xf32>,
    %c0_24 = arith.constant 0 : index
    %c0_25 = arith.constant 0 : index
    %57 = vector.load %arg6[%c0_24, %c0_25] : memref<16x104xf32, #tpu.memory_space<vmem>>, vector<16x104xf32>
    %c0_26 = arith.constant 0 : index
    %c0_27 = arith.constant 0 : index
    %58 = vector.load %arg9[%c0_26, %c0_27] : memref<104x128xf32, #tpu.memory_space<vmem>>, vector<104x128xf32>
    %cst_28 = arith.constant dense<0.000000e+00> : vector<16x128xf32>
    %59 = tpu.matmul %57, %58, %cst_28 {dimension_numbers = #tpu.dot_dimension_numbers<[1], [0], [0], [1], [0, 0, 1, 1], [], []>} : vector<16x104xf32>, vector<104x128xf32>, vector<16x128xf32> -> vector<16x128xf32>
    %c0_29 = arith.constant 0 : index
    %c0_30 = arith.constant 0 : index
    %60 = vector.load %arg7[%c0_29, %c0_30] : memref<16x128xf32, #tpu.memory_space<vmem>>, vector<16x128xf32>
    tpu.vector_store %arg7[%c0_29, %c0_30], %59 {strides = array<i32>} : memref<16x128xf32, #tpu.memory_space<vmem>>, vector<16x128xf32>,
    return
  }
  func.func @transform_0(%arg0: i32) -> (i32, i32) {
    %c0_i32 = arith.constant 0 : i32
    %c0_i32_0 = arith.constant 0 : i32
    return %c0_i32, %arg0 : i32, i32
  }
  func.func @transform_1(%arg0: i32) -> (i32, i32) {
    %c0_i32 = arith.constant 0 : i32
    %c0_i32_0 = arith.constant 0 : i32
    %c0_i32_1 = arith.constant 0 : i32
    return %c0_i32, %c0_i32_0 : i32, i32
  }
  func.func @transform_2(%arg0: i32) -> (i32, i32) {
    %c0_i32 = arith.constant 0 : i32
    %c0_i32_0 = arith.constant 0 : i32
    %c0_i32_1 = arith.constant 0 : i32
    return %c0_i32, %c0_i32_0 : i32, i32
  }
  func.func @transform_3(%arg0: i32) -> (i32, i32) {
    %c0_i32 = arith.constant 0 : i32
    %c0_i32_0 = arith.constant 0 : i32
    %c0_i32_1 = arith.constant 0 : i32
    return %c0_i32, %c0_i32_0 : i32, i32
  }
  func.func @transform_4(%arg0: i32) -> (i32, i32) {
    %c0_i32 = arith.constant 0 : i32
    %c0_i32_0 = arith.constant 0 : i32
    %c0_i32_1 = arith.constant 0 : i32
    return %c0_i32, %c0_i32_0 : i32, i32
  }
  func.func @transform_5(%arg0: i32) -> (i32, i32) {
    %c0_i32 = arith.constant 0 : i32
    %c0_i32_0 = arith.constant 0 : i32
    %c0_i32_1 = arith.constant 0 : i32
    return %c0_i32, %c0_i32_0 : i32, i32
  }
  func.func @transform_6(%arg0: i32) -> (i32, i32) {
    %c0_i32 = arith.constant 0 : i32
    %c0_i32_0 = arith.constant 0 : i32
    return %c0_i32, %arg0 : i32, i32
  }
}

</mosaic_0001>

<llo_original>
// kernel: neg.1
$region0: #{neg.1}
  #allocation0 [shape = 's32[1]{0}', space=sflag, size = 0x4, scoped, tag = 'scoped memory for neg.1']
  %s0 = inlined_call_operand.vmem [shape: f32[4,32], index: 0, kind: input, shape index: {}]
  %s1 = inlined_call_operand.vmem [shape: f32[4,32], index: 1, kind: output, shape index: {}]
  %v2 = vld [vmem:[%s0] sm:$0xf]
  %3 = xla_tuple %v2
  %4 = xla_tuple %3
  %v5 = vxor.u32 %v2, 2147483648
  %6 = xla_tuple %v5
  %7 = vst [vmem:[%s1] sm:$0xf] %v5

// kernel: _affine_net2d_call.1
$region0: #{_affine_net2d_call.1}
  #allocation0 [shape = 'u32[]', space=smem, size = 0x4, offset = 0x4, fixed_abs, tag = 'smem constant byte address 0x4 - core index']
  #allocation1 [shape = 'u32[144,128]{1,0:T(1,128)}', space=vmem, size = 0x12000, scoped, tag = 'internal scratch']
  #allocation2 [shape = 'f32[64,128]{1,0:T(8,128)}', space=vmem, size = 0x8000, scoped, tag = 'scratch operand']
  #allocation3 [shape = 'f32[104,128]{1,0:T(8,128)}', space=vmem, size = 0xd000, scoped, tag = 'scratch operand']
  %s0 = inlined_call_operand.vmem [shape: f32[2,256], index: 0, kind: input, shape index: {}]
  %s1 = inlined_call_operand.vmem [shape: f32[32,2], index: 1, kind: input, shape index: {}]
  %s2 = inlined_call_operand.vmem [shape: f32[32,1], index: 2, kind: input, shape index: {}]
  %s3 = inlined_call_operand.vmem [shape: f32[32,1], index: 3, kind: input, shape index: {}]
  %s4 = inlined_call_operand.vmem [shape: f32[96,64], index: 4, kind: input, shape index: {}]
  %s5 = inlined_call_operand.vmem [shape: f32[16,104], index: 5, kind: input, shape index: {}]
  %s6 = inlined_call_operand.vmem [shape: f32[16,256], index: 6, kind: output, shape index: {}]
  %s7 = sld [smem:[#allocation0]]
  $region91: #{_affine_net2d_call.1} parent=0
    _
  %s9 = ssub.s32 1, %s7
  %s10 = scalar_select 0, %s9, %s7
  $region1: #{_affine_net2d_call.1} parent=0
    #allocation4 [shape = 'u8[16384]{0}', space=vmem, size = 0x4000, scoped, tag = 'output window, operand 0']
    loop: start=0, step=1, limit=4
    $region2: #{_affine_net2d_call.1} parent=1 // loop_pre_header
      _
    $region3: #{_affine_net2d_call.1} parent=1 // loop_header
      %s12 = sphi 0, %s16
      %p13 = scmp.ge.s32.totalorder %s12, 4
      %s22 = sphi 0, %s24
      %s25 = sphi 0, %s22
      %s26 = sphi 0, %s25
      %s42 = sphi 0, %s26
      %s46 = sphi 0, %s46
      %s48 = sphi 0, %s46
      %s49 = sphi 0, %s48
      %s63 = sphi 0, %s49
      %s67 = sphi 0, %s67
      %s69 = sphi 0, %s67
      %s70 = sphi 0, %s69
      %s84 = sphi 0, %s70
      %s88 = sphi 0, %s88
      %s90 = sphi 0, %s88
      %s91 = sphi 0, %s90
      %s105 = sphi 0, %s91
      %s109 = sphi 0, %s109
      %s111 = sphi 0, %s109
      %s112 = sphi 0, %s111
      %s126 = sphi 0, %s112
      %s130 = sphi 0, %s130
      %s132 = sphi 0, %s130
      %s133 = sphi 0, %s132
      %s147 = sphi 0, %s133
      %s153 = sphi 0, %s155
      %s156 = sphi 0, %s153
      %s157 = sphi 0, %s156
      %s173 = sphi 0, %s157
    $region4: #{_affine_net2d_call.1} parent=1 // loop_header_branch
      %15 = sbr.rel (%p13) target = $region8
    $region5: #{_affine_net2d_call.1} parent=1 // loop_body
      %s17 = ssub.s32 %s12, 1
      %s18 = ssub.s32 %s12, 2
      %s19 = sadd.s32 %s12, 1
      %s20 = ssub.s32 %s12, %s19
      %p21 = scmp.eq.s32.totalorder %s20, 0
      %s23 = sadd.s32 %s22, 1
      %s24 = scalar_select %p21, %s22, %s23
      %p27 = pneg %p21
      %p28 = scmp.eq.s32.totalorder %s12, 1
      %p29 = por %p27, %p28
      %p30 = scmp.ne.s32.totalorder %s22, %s25
      %p31 = scmp.eq.s32.totalorder %s12, 0
      %p32 = por %p30, %p31
      %p33 = scmp.ne.s32.totalorder %s22, %s25
      %p34 = scmp.eq.s32.totalorder %s17, 1
      %p35 = por %p33, %p34
      %p36 = scmp.ne.s32.totalorder %s25, %s26
      %p37 = scmp.eq.s32.totalorder %s17, 0
      %p38 = por %p36, %p37
      %p39 = scmp.ne.s32.totalorder %s25, %s26
      %p40 = scmp.eq.s32.totalorder %s18, 1
      %p41 = por %p39, %p40
      %p43 = scmp.ne.s32.totalorder %s26, %s42
      %p44 = scmp.eq.s32.totalorder %s18, 0
      %p45 = por %p43, %p44
      %s47 = sadd.s32 %s46, 1
      %p50 = scmp.eq.s32.totalorder %s12, 1
      %p51 = scmp.ne.s32.totalorder %s46, %s48
      %p52 = scmp.eq.s32.totalorder %s12, 0
      %p53 = por %p51, %p52
      %p54 = scmp.ne.s32.totalorder %s46, %s48
      %p55 = scmp.eq.s32.totalorder %s17, 1
      %p56 = por %p54, %p55
      %p57 = scmp.ne.s32.totalorder %s48, %s49
      %p58 = scmp.eq.s32.totalorder %s17, 0
      %p59 = por %p57, %p58
      %p60 = scmp.ne.s32.totalorder %s48, %s49
      %p61 = scmp.eq.s32.totalorder %s18, 1
      %p62 = por %p60, %p61
      %p64 = scmp.ne.s32.totalorder %s49, %s63
      %p65 = scmp.eq.s32.totalorder %s18, 0
      %p66 = por %p64, %p65
      %s68 = sadd.s32 %s67, 1
      %p71 = scmp.eq.s32.totalorder %s12, 1
      %p72 = scmp.ne.s32.totalorder %s67, %s69
      %p73 = scmp.eq.s32.totalorder %s12, 0
      %p74 = por %p72, %p73
      %p75 = scmp.ne.s32.totalorder %s67, %s69
      %p76 = scmp.eq.s32.totalorder %s17, 1
      %p77 = por %p75, %p76
      %p78 = scmp.ne.s32.totalorder %s69, %s70
      %p79 = scmp.eq.s32.totalorder %s17, 0
      %p80 = por %p78, %p79
      %p81 = scmp.ne.s32.totalorder %s69, %s70
      %p82 = scmp.eq.s32.totalorder %s18, 1
      %p83 = por %p81, %p82
      %p85 = scmp.ne.s32.totalorder %s70, %s84
      %p86 = scmp.eq.s32.totalorder %s18, 0
      %p87 = por %p85, %p86
      %s89 = sadd.s32 %s88, 1
      %p92 = scmp.eq.s32.totalorder %s12, 1
      %p93 = scmp.ne.s32.totalorder %s88, %s90
      %p94 = scmp.eq.s32.totalorder %s12, 0
      %p95 = por %p93, %p94
      %p96 = scmp.ne.s32.totalorder %s88, %s90
      %p97 = scmp.eq.s32.totalorder %s17, 1
      %p98 = por %p96, %p97
      %p99 = scmp.ne.s32.totalorder %s90, %s91
      %p100 = scmp.eq.s32.totalorder %s17, 0
      %p101 = por %p99, %p100
      %p102 = scmp.ne.s32.totalorder %s90, %s91
      %p103 = scmp.eq.s32.totalorder %s18, 1
      %p104 = por %p102, %p103
      %p106 = scmp.ne.s32.totalorder %s91, %s105
      %p107 = scmp.eq.s32.totalorder %s18, 0
      %p108 = por %p106, %p107
      %s110 = sadd.s32 %s109, 1
      %p113 = scmp.eq.s32.totalorder %s12, 1
      %p114 = scmp.ne.s32.totalorder %s109, %s111
      %p115 = scmp.eq.s32.totalorder %s12, 0
      %p116 = por %p114, %p115
      %p117 = scmp.ne.s32.totalorder %s109, %s111
      %p118 = scmp.eq.s32.totalorder %s17, 1
      %p119 = por %p117, %p118
      %p120 = scmp.ne.s32.totalorder %s111, %s112
      %p121 = scmp.eq.s32.totalorder %s17, 0
      %p122 = por %p120, %p121
      %p123 = scmp.ne.s32.totalorder %s111, %s112
      %p124 = scmp.eq.s32.totalorder %s18, 1
      %p125 = por %p123, %p124
      %p127 = scmp.ne.s32.totalorder %s112, %s126
      %p128 = scmp.eq.s32.totalorder %s18, 0
      %p129 = por %p127, %p128
      %s131 = sadd.s32 %s130, 1
      %p134 = scmp.eq.s32.totalorder %s12, 1
      %p135 = scmp.ne.s32.totalorder %s130, %s132
      %p136 = scmp.eq.s32.totalorder %s12, 0
      %p137 = por %p135, %p136
      %p138 = scmp.ne.s32.totalorder %s130, %s132
      %p139 = scmp.eq.s32.totalorder %s17, 1
      %p140 = por %p138, %p139
      %p141 = scmp.ne.s32.totalorder %s132, %s133
      %p142 = scmp.eq.s32.totalorder %s17, 0
      %p143 = por %p141, %p142
      %p144 = scmp.ne.s32.totalorder %s132, %s133
      %p145 = scmp.eq.s32.totalorder %s18, 1
      %p146 = por %p144, %p145
      %p148 = scmp.ne.s32.totalorder %s133, %s147
      %p149 = scmp.eq.s32.totalorder %s18, 0
      %p150 = por %p148, %p149
      %s151 = ssub.s32 %s12, %s19
      %p152 = scmp.eq.s32.totalorder %s151, 0
      %s154 = sadd.s32 %s153, 1
      %s155 = scalar_select %p152, %s153, %s154
      %p158 = pneg %p152
      %p159 = scmp.eq.s32.totalorder %s12, 1
      %p160 = por %p158, %p159
      %p161 = scmp.ne.s32.totalorder %s153, %s156
      %p162 = scmp.eq.s32.totalorder %s12, 0
      %p163 = por %p161, %p162
      %p164 = scmp.ne.s32.totalorder %s153, %s156
      %p165 = scmp.eq.s32.totalorder %s17, 1
      %p166 = por %p164, %p165
      %p167 = scmp.ne.s32.totalorder %s156, %s157
      %p168 = scmp.eq.s32.totalorder %s17, 0
      %p169 = por %p167, %p168
      %p170 = scmp.ne.s32.totalorder %s156, %s157
      %p171 = scmp.eq.s32.totalorder %s18, 1
      %p172 = por %p170, %p171
      %p174 = scmp.ne.s32.totalorder %s157, %s173
      %p175 = scmp.eq.s32.totalorder %s18, 0
      %p176 = por %p174, %p175
      %p177 = scmp.le.s32.totalorder 1, %s12
      %p178 = scmp.lt.s32.totalorder %s12, 3
      %p179 = pnand %p177, %p178
      %p180 = pneg %p179
      // Predicated region
      $region9: #{_affine_net2d_call.1} parent=5 // pred_check
        _
      $region10: #{_affine_net2d_call.1} parent=5 // pred_check_branch
        %182 = sbr.rel (%p179) target = $region12
      $region11: #{_affine_net2d_call.1} parent=5 // pred_region
        %s183 = ssub.s32 %s12, 1
        // Predicated region
        $region13: #{_affine_net2d_call.1} parent=11 // pred_check
          %p184 = pneg %p59
        $region14: #{_affine_net2d_call.1} parent=11 // pred_check_branch
          %186 = sbr.rel (%p184) target = $region16
        $region15: #{_affine_net2d_call.1} parent=11 // pred_region
          _
        $region16: #{_affine_net2d_call.1} parent=11 // pred_fallthru
          _
        // Predicated region
        $region17: #{_affine_net2d_call.1} parent=11 // pred_check
          %p187 = pneg %p80
        $region18: #{_affine_net2d_call.1} parent=11 // pred_check_branch
          %189 = sbr.rel (%p187) target = $region20
        $region19: #{_affine_net2d_call.1} parent=11 // pred_region
          _
        $region20: #{_affine_net2d_call.1} parent=11 // pred_fallthru
          _
        // Predicated region
        $region21: #{_affine_net2d_call.1} parent=11 // pred_check
          %p190 = pneg %p101
        $region22: #{_affine_net2d_call.1} parent=11 // pred_check_branch
          %192 = sbr.rel (%p190) target = $region24
        $region23: #{_affine_net2d_call.1} parent=11 // pred_region
          _
        $region24: #{_affine_net2d_call.1} parent=11 // pred_fallthru
          _
        // Predicated region
        $region25: #{_affine_net2d_call.1} parent=11 // pred_check
          %p193 = pneg %p122
        $region26: #{_affine_net2d_call.1} parent=11 // pred_check_branch
          %195 = sbr.rel (%p193) target = $region28
        $region27: #{_affine_net2d_call.1} parent=11 // pred_region
          _
        $region28: #{_affine_net2d_call.1} parent=11 // pred_fallthru
          _
        // Predicated region
        $region29: #{_affine_net2d_call.1} parent=11 // pred_check
          %p196 = pneg %p143
        $region30: #{_affine_net2d_call.1} parent=11 // pred_check_branch
          %198 = sbr.rel (%p196) target = $region32
        $region31: #{_affine_net2d_call.1} parent=11 // pred_region
          _
        $region32: #{_affine_net2d_call.1} parent=11 // pred_fallthru
          _
      $region12: #{_affine_net2d_call.1} parent=5 // pred_fallthru
        _
      %p199 = scmp.lt.s32.totalorder %s12, 2
      // Predicated region
      $region33: #{_affine_net2d_call.1} parent=5 // pred_check
        %p200 = pneg %p199
      $region34: #{_affine_net2d_call.1} parent=5 // pred_check_branch
        %202 = sbr.rel (%p200) target = $region36
      $region35: #{_affine_net2d_call.1} parent=5 // pred_region
        // Predicated region
        $region37: #{_affine_net2d_call.1} parent=35 // pred_check
          %p203 = pneg %p32
        $region38: #{_affine_net2d_call.1} parent=35 // pred_check_branch
          %205 = sbr.rel (%p203) target = $region40
        $region39: #{_affine_net2d_call.1} parent=35 // pred_region
          %p206 = scmp.lt.s32.totalorder %s12, 1
          %s207 = scalar_select %p206, %s12, 1
          %s208 = smul.addr %s207, 2
          %s209 = scalar_lea.vmem %s0, %s208
        $region40: #{_affine_net2d_call.1} parent=35 // pred_fallthru
          _
      $region36: #{_affine_net2d_call.1} parent=5 // pred_fallthru
        _
      %p210 = scmp.le.s32.totalorder 1, %s12
      %p211 = scmp.lt.s32.totalorder %s12, 3
      %p212 = pnand %p210, %p211
      %p213 = pneg %p212
      // Predicated region
      $region41: #{_affine_net2d_call.1} parent=5 // pred_check
        _
      $region42: #{_affine_net2d_call.1} parent=5 // pred_check_branch
        %215 = sbr.rel (%p212) target = $region44
      $region43: #{_affine_net2d_call.1} parent=5 // pred_region
        %s216 = ssub.s32 %s12, 1
        %p217 = scmp.lt.s32.totalorder %s17, 1
        %s218 = scalar_select %p217, %s17, 1
        %s219 = smul.addr %s218, 2
        %s220 = scalar_lea.vmem %s0, %s219
        %p221 = pneg %p38
        %p222 = pneg %p35
        %p223 = pneg %p59
        %p224 = pneg %p56
        %p225 = pneg %p80
        %p226 = pneg %p77
        %p227 = pneg %p101
        %p228 = pneg %p98
        %p229 = pneg %p122
        %p230 = pneg %p119
        %p231 = pneg %p143
        %p232 = pneg %p140
        %p233 = pneg %p169
        %p234 = pneg %p166
        %s235 = sand.u32 %s156, 1
        %s236 = sand.u32 %s156, 1
        %s237 = smul.addr %s236, 16
        %s238 = scalar_lea.vmem [#allocation4], %s237
        %p239 = scmp.lt.s32.totalorder %s17, 1
        %s240 = scalar_select %p239, %s17, 1
        %s241 = smul.addr %s240, 2
        %s242 = scalar_lea.vmem %s0, %s241
        %v243 = vld [vmem:[%s242] sm:$0x3]
        %v244 = vld [vmem:[%s1] sm:$0xff]
        %v245 = vld [vmem:[%s1 + $0x8] sm:$0xff]
        %v246 = vld [vmem:[%s1 + $0x10] sm:$0xff]
        %v247 = vld [vmem:[%s1 + $0x18] sm:$0xff]
        %249 = vset.pattern.permute.xlu0 0
        %250 = vperm.xlu0 %249, %v244
        %v251 = vpop.permute.xlu0 %250
        %254 = vset.pattern.permute.xlu0 0
        %255 = vperm.xlu0 %254, %v245
        %v256 = vpop.permute.xlu0 %255
        %259 = vset.pattern.permute.xlu0 0
        %260 = vperm.xlu0 %259, %v246
        %v261 = vpop.permute.xlu0 %260
        %264 = vset.pattern.permute.xlu0 0
        %265 = vperm.xlu0 %264, %v247
        %v266 = vpop.permute.xlu0 %265
        %v268 = vlaneseq
        %v269 = vshrl.u32 %v268, 7
        %v270 = vsub.s32 0, %v269
        %v271 = vrot.slane %v243, %v270
        %v272 = vmul.f32 %v251, %v271
        %v273 = vmul.f32 %v256, %v271
        %v274 = vmul.f32 %v261, %v271
        %v275 = vmul.f32 %v266, %v271
        %276 = vset.pattern.permute.xlu0 1
        %277 = vperm.xlu0 %276, %v244
        %v278 = vpop.permute.xlu0 %277
        %280 = vset.pattern.permute.xlu0 1
        %281 = vperm.xlu0 %280, %v245
        %v282 = vpop.permute.xlu0 %281
        %284 = vset.pattern.permute.xlu0 1
        %285 = vperm.xlu0 %284, %v246
        %v286 = vpop.permute.xlu0 %285
        %288 = vset.pattern.permute.xlu0 1
        %289 = vperm.xlu0 %288, %v247
        %v290 = vpop.permute.xlu0 %289
        %v292 = vlaneseq
        %v293 = vshrl.u32 %v292, 7
        %v294 = vsub.s32 1, %v293
        %v295 = vrot.slane %v243, %v294
        %v296 = vmul.f32 %v278, %v295
        %v297 = vmul.f32 %v282, %v295
        %v298 = vmul.f32 %v286, %v295
        %v299 = vmul.f32 %v290, %v295
        %v300 = vadd.f32 %v272, %v296
        %v301 = vadd.f32 %v273, %v297
        %v302 = vadd.f32 %v274, %v298
        %v303 = vadd.f32 %v275, %v299
        %v304 = vld [vmem:[%s2] sm:$0xff]
        %v305 = vld [vmem:[%s2 + $0x8] sm:$0xff]
        %v306 = vld [vmem:[%s2 + $0x10] sm:$0xff]
        %v307 = vld [vmem:[%s2 + $0x18] sm:$0xff]
        %309 = vset.pattern.permute.xlu0 0
        %310 = vperm.xlu0 %309, %v304
        %v311 = vpop.permute.xlu0 %310
        %314 = vset.pattern.permute.xlu0 0
        %315 = vperm.xlu0 %314, %v305
        %v316 = vpop.permute.xlu0 %315
        %319 = vset.pattern.permute.xlu0 0
        %320 = vperm.xlu0 %319, %v306
        %v321 = vpop.permute.xlu0 %320
        %324 = vset.pattern.permute.xlu0 0
        %325 = vperm.xlu0 %324, %v307
        %v326 = vpop.permute.xlu0 %325
        %v328 = vadd.f32 %v300, %v311
        %v329 = vadd.f32 %v301, %v316
        %v330 = vadd.f32 %v302, %v321
        %v331 = vadd.f32 %v303, %v326
        %v332 = vtanh.pop %v328
        %v333 = vtanh.pop %v329
        %v334 = vtanh.pop %v330
        %v335 = vtanh.pop %v331
        %336 = vst [vmem:[#allocation2] sm:$0xff] %v332
        %337 = vst [vmem:[#allocation2 + $0x8] sm:$0xff] %v333
        %338 = vst [vmem:[#allocation2 + $0x10] sm:$0xff] %v334
        %339 = vst [vmem:[#allocation2 + $0x18] sm:$0xff] %v335
        %v340 = vmul.f32 %v332, %v332
        %v341 = vmul.f32 %v333, %v333
        %v342 = vmul.f32 %v334, %v334
        %v343 = vmul.f32 %v335, %v335
        %v344 = vsub.f32 1.0, %v340
        %v345 = vsub.f32 1.0, %v341
        %v346 = vsub.f32 1.0, %v342
        %v347 = vsub.f32 1.0, %v343
        %348 = vst [vmem:[#allocation2 + $0x20] sm:$0xff] %v344
        %349 = vst [vmem:[#allocation2 + $0x28] sm:$0xff] %v345
        %350 = vst [vmem:[#allocation2 + $0x30] sm:$0xff] %v346
        %351 = vst [vmem:[#allocation2 + $0x38] sm:$0xff] %v347
        %v352 = vld [vmem:[%s4] sm:$0xff]
        %v353 = vld [vmem:[%s4 + $0x8] sm:$0xff]
        %v354 = vld [vmem:[%s4 + $0x10] sm:$0xff]
        %v355 = vld [vmem:[%s4 + $0x18] sm:$0xff]
        %v356 = vld [vmem:[%s4 + $0x20] sm:$0xff]
        %v357 = vld [vmem:[%s4 + $0x28] sm:$0xff]
        %v358 = vld [vmem:[%s4 + $0x30] sm:$0xff]
        %v359 = vld [vmem:[%s4 + $0x38] sm:$0xff]
        %v360 = vld [vmem:[%s4 + $0x40] sm:$0xff]
        %v361 = vld [vmem:[%s4 + $0x48] sm:$0xff]
        %v362 = vld [vmem:[%s4 + $0x50] sm:$0xff]
        %v363 = vld [vmem:[%s4 + $0x58] sm:$0xff]
        %v364 = vld [vmem:[#allocation2] sm:$0xff]
        %v365 = vld [vmem:[#allocation2 + $0x8] sm:$0xff]
        %v366 = vld [vmem:[#allocation2 + $0x10] sm:$0xff]
        %v367 = vld [vmem:[#allocation2 + $0x18] sm:$0xff]
        %v368 = vld [vmem:[#allocation2 + $0x20] sm:$0xff]
        %v369 = vld [vmem:[#allocation2 + $0x28] sm:$0xff]
        %v370 = vld [vmem:[#allocation2 + $0x30] sm:$0xff]
        %v371 = vld [vmem:[#allocation2 + $0x38] sm:$0xff]
        %vm372 = vcmask 523264
        %v374 = vsel %vm372, %v352, 0
        %v377 = vsel %vm372, %v353, 0
        %v380 = vsel %vm372, %v354, 0
        %v383 = vsel %vm372, %v355, 0
        %v386 = vsel %vm372, %v356, 0
        %v389 = vsel %vm372, %v357, 0
        %v392 = vsel %vm372, %v358, 0
        %v395 = vsel %vm372, %v359, 0
        %v398 = vsel %vm372, %v360, 0
        %v401 = vsel %vm372, %v361, 0
        %v404 = vsel %vm372, %v362, 0
        %v407 = vsel %vm372, %v363, 0
        %409 = vmatprep.subr.mxu0 0.0
        %410 = vmatpush1.msra.mxu0 %v364
        %411 = vmatprep.subr.mxu0 0.0
        %412 = vmatpush1.msra.mxu0 %v365
        %413 = vmatprep.subr.mxu0 0.0
        %414 = vmatpush1.msra.mxu0 %v366
        %415 = vmatprep.subr.mxu0 0.0
        %416 = vmatpush1.msra.mxu0 %v367
        %417 = vmatprep.subr.mxu0 0.0
        %418 = vmatpush1.msra.mxu0 %v368
        %419 = vmatprep.subr.mxu0 0.0
        %420 = vmatpush1.msra.mxu0 %v369
        %421 = vmatprep.subr.mxu0 0.0
        %422 = vmatpush1.msra.mxu0 %v370
        %423 = vmatprep.subr.mxu0 0.0
        %424 = vmatpush1.msra.mxu0 %v371
        %425 = vmatprep.subr.mxu0 0.0
        %426 = vmatpush1.msra.mxu0 0.0
        %427 = vmatprep.subr.mxu0 0.0
        %428 = vmatpush1.msra.mxu0 0.0
        %429 = vmatprep.subr.mxu0 0.0
        %430 = vmatpush1.msra.mxu0 0.0
        %431 = vmatprep.subr.mxu0 0.0
        %432 = vmatpush1.msra.mxu0 0.0
        %433 = vmatprep.subr.mxu0 0.0
        %434 = vmatpush1.msra.mxu0 0.0
        %435 = vmatprep.subr.mxu0 0.0
        %436 = vmatpush1.msra.mxu0 0.0
        %437 = vmatprep.subr.mxu0 0.0
        %438 = vmatpush1.msra.mxu0 0.0
        %439 = vmatprep.subr.mxu0 0.0
        %440 = vmatpush1.msra.mxu0 0.0
        %441 = vmatprep.subr.mxu0 0.0
        %442 = vmatpush1.msra.mxu0 0.0
        %443 = vmatprep.subr.mxu0 0.0
        %444 = vmatpush1.msra.mxu0 0.0
        %445 = vmatprep.subr.mxu0 0.0
        %446 = vmatpush1.msra.mxu0 0.0
        %447 = vmatprep.subr.mxu0 0.0
        %448 = vmatpush1.msra.mxu0 0.0
        %449 = vmatprep.subr.mxu0 0.0
        %450 = vmatpush1.msra.mxu0 0.0
        %451 = vmatprep.subr.mxu0 0.0
        %452 = vmatpush1.msra.mxu0 0.0
        %453 = vmatprep.subr.mxu0 0.0
        %454 = vmatpush1.msra.mxu0 0.0
        %455 = vmatprep.subr.mxu0 0.0
        %456 = vmatpush1.msra.mxu0 0.0
        %457 = vmatprep.subr.mxu0 0.0
        %458 = vmatpush1.msra.mxu0 0.0
        %459 = vmatprep.subr.mxu0 0.0
        %460 = vmatpush1.msra.mxu0 0.0
        %461 = vmatprep.subr.mxu0 0.0
        %462 = vmatpush1.msra.mxu0 0.0
        %463 = vmatprep.subr.mxu0 0.0
        %464 = vmatpush1.msra.mxu0 0.0
        %465 = vmatprep.subr.mxu0 0.0
        %466 = vmatpush1.msra.mxu0 0.0
        %467 = vmatprep.subr.mxu0 0.0
        %468 = vmatpush1.msra.mxu0 0.0
        %469 = vmatprep.subr.mxu0 0.0
        %470 = vmatpush1.msra.mxu0 0.0
        %471 = vmatprep.subr.mxu0 0.0
        %472 = vmatpush1.msra.mxu0 0.0
        %473 = vmatprep.mubr.f32.mxu0 0.0
        %474 = vmatmul.mubr.f32.gmra.mrb[0].mxu0 %v374
        %v475 = vpop.f32.mrb[0].mxu0
        %v476 = vadd.f32 0.0, %v475
        %v477 = vpop.f32.mrb[0].mxu0
        %478 = vmatprep.mubr.f32.mxu0 0.0
        %479 = vmatmul.mubr.f32.gmra.mrb[0].mxu0 %v377
        %v480 = vpop.f32.mrb[0].mxu0
        %v481 = vadd.f32 0.0, %v480
        %v482 = vpop.f32.mrb[0].mxu0
        %483 = vmatprep.mubr.f32.mxu0 0.0
        %484 = vmatmul.mubr.f32.gmra.mrb[0].mxu0 %v380
        %v485 = vpop.f32.mrb[0].mxu0
        %v486 = vadd.f32 0.0, %v485
        %v487 = vpop.f32.mrb[0].mxu0
        %488 = vmatprep.mubr.f32.mxu0 0.0
        %489 = vmatmul.mubr.f32.gmra.mrb[0].mxu0 %v383
        %v490 = vpop.f32.mrb[0].mxu0
        %v491 = vadd.f32 0.0, %v490
        %v492 = vpop.f32.mrb[0].mxu0
        %493 = vmatprep.mubr.f32.mxu0 0.0
        %494 = vmatmul.mubr.f32.gmra.mrb[0].mxu0 %v386
        %v495 = vpop.f32.mrb[0].mxu0
        %v496 = vadd.f32 0.0, %v495
        %v497 = vpop.f32.mrb[0].mxu0
        %498 = vmatprep.mubr.f32.mxu0 0.0
        %499 = vmatmul.mubr.f32.gmra.mrb[0].mxu0 %v389
        %v500 = vpop.f32.mrb[0].mxu0
        %v501 = vadd.f32 0.0, %v500
        %v502 = vpop.f32.mrb[0].mxu0
        %503 = vmatprep.mubr.f32.mxu0 0.0
        %504 = vmatmul.mubr.f32.gmra.mrb[0].mxu0 %v392
        %v505 = vpop.f32.mrb[0].mxu0
        %v506 = vadd.f32 0.0, %v505
        %v507 = vpop.f32.mrb[0].mxu0
        %508 = vmatprep.mubr.f32.mxu0 0.0
        %509 = vmatmul.mubr.f32.gmra.mrb[0].mxu0 %v395
        %v510 = vpop.f32.mrb[0].mxu0
        %v511 = vadd.f32 0.0, %v510
        %v512 = vpop.f32.mrb[0].mxu0
        %513 = vmatprep.mubr.f32.mxu0 0.0
        %514 = vmatmul.mubr.f32.gmra.mrb[0].mxu0 %v398
        %v515 = vpop.f32.mrb[0].mxu0
        %v516 = vadd.f32 0.0, %v515
        %v517 = vpop.f32.mrb[0].mxu0
        %518 = vmatprep.mubr.f32.mxu0 0.0
        %519 = vmatmul.mubr.f32.gmra.mrb[0].mxu0 %v401
        %v520 = vpop.f32.mrb[0].mxu0
        %v521 = vadd.f32 0.0, %v520
        %v522 = vpop.f32.mrb[0].mxu0
        %523 = vmatprep.mubr.f32.mxu0 0.0
        %524 = vmatmul.mubr.f32.gmra.mrb[0].mxu0 %v404
        %v525 = vpop.f32.mrb[0].mxu0
        %v526 = vadd.f32 0.0, %v525
        %v527 = vpop.f32.mrb[0].mxu0
        %528 = vmatprep.mubr.f32.mxu0 0.0
        %529 = vmatmul.mubr.f32.gmra.mrb[0].mxu0 %v407
        %v530 = vpop.f32.mrb[0].mxu0
        %v531 = vadd.f32 0.0, %v530
        %v532 = vpop.f32.mrb[0].mxu0
        %533 = vdwg.mxu0
        %v534 = vld [vmem:[%s3] sm:$0xff]
        %v535 = vld [vmem:[%s3 + $0x8] sm:$0xff]
        %v536 = vld [vmem:[%s3 + $0x10] sm:$0xff]
        %v537 = vld [vmem:[%s3 + $0x18] sm:$0xff]
        %539 = vset.pattern.permute.xlu0 0
        %540 = vperm.xlu0 %539, %v534
        %v541 = vpop.permute.xlu0 %540
        %544 = vset.pattern.permute.xlu0 0
        %545 = vperm.xlu0 %544, %v535
        %v546 = vpop.permute.xlu0 %545
        %549 = vset.pattern.permute.xlu0 0
        %550 = vperm.xlu0 %549, %v536
        %v551 = vpop.permute.xlu0 %550
        %554 = vset.pattern.permute.xlu0 0
        %555 = vperm.xlu0 %554, %v537
        %v556 = vpop.permute.xlu0 %555
        %v558 = vadd.f32 %v476, %v541
        %v559 = vadd.f32 %v481, %v546
        %v560 = vadd.f32 %v486, %v551
        %v561 = vadd.f32 %v491, %v556
        %v562 = vtanh.pop %v558
        %v563 = vtanh.pop %v559
        %v564 = vtanh.pop %v560
        %v565 = vtanh.pop %v561
        %v566 = vmul.f32 %v562, %v562
        %v567 = vmul.f32 %v563, %v563
        %v568 = vmul.f32 %v564, %v564
        %v569 = vmul.f32 %v565, %v565
        %v570 = vsub.f32 1.0, %v566
        %v571 = vsub.f32 1.0, %v567
        %v572 = vsub.f32 1.0, %v568
        %v573 = vsub.f32 1.0, %v569
        %574 = vst [vmem:[#allocation3] sm:$0xff] %v562
        %575 = vst [vmem:[#allocation3 + $0x8] sm:$0xff] %v563
        %576 = vst [vmem:[#allocation3 + $0x10] sm:$0xff] %v564
        %577 = vst [vmem:[#allocation3 + $0x18] sm:$0xff] %v565
        %v578 = vmul.f32 %v570, %v496
        %v579 = vmul.f32 %v571, %v501
        %v580 = vmul.f32 %v572, %v506
        %v581 = vmul.f32 %v573, %v511
        %582 = vst [vmem:[#allocation3 + $0x20] sm:$0xff] %v578
        %583 = vst [vmem:[#allocation3 + $0x28] sm:$0xff] %v579
        %584 = vst [vmem:[#allocation3 + $0x30] sm:$0xff] %v580
        %585 = vst [vmem:[#allocation3 + $0x38] sm:$0xff] %v581
        %v586 = vmul.f32 %v570, %v516
        %v587 = vmul.f32 %v571, %v521
        %v588 = vmul.f32 %v572, %v526
        %v589 = vmul.f32 %v573, %v531
        %590 = vst [vmem:[#allocation3 + $0x40] sm:$0xff] %v586
        %591 = vst [vmem:[#allocation3 + $0x48] sm:$0xff] %v587
        %592 = vst [vmem:[#allocation3 + $0x50] sm:$0xff] %v588
        %593 = vst [vmem:[#allocation3 + $0x58] sm:$0xff] %v589
        %v594 = vlaneseq
        %v595 = vshrl.u32 %v594, 7
        %vm596 = vcmp.eq.s32.totalorder %v595, 0
        %vm597 = vcmp.eq.s32.totalorder %v595, 1
        %vm598 = vcmp.eq.s32.totalorder %v595, 2
        %v599 = vsel %vm598, 1.0, 0.0
        %v600 = vsel %vm597, %v295, %v599
        %v601 = vsel %vm596, %v271, %v600
        %602 = vst [vmem:[#allocation3 + $0x60] sm:$0xff] %v601
        %v603 = vld [vmem:[%s5] sm:$0xff]
        %v604 = vld [vmem:[%s5 + $0x8] sm:$0xff]
        %v605 = vld [vmem:[#allocation3] sm:$0xff]
        %v606 = vld [vmem:[#allocation3 + $0x8] sm:$0xff]
        %v607 = vld [vmem:[#allocation3 + $0x10] sm:$0xff]
        %v608 = vld [vmem:[#allocation3 + $0x18] sm:$0xff]
        %v609 = vld [vmem:[#allocation3 + $0x20] sm:$0xff]
        %v610 = vld [vmem:[#allocation3 + $0x28] sm:$0xff]
        %v611 = vld [vmem:[#allocation3 + $0x30] sm:$0xff]
        %v612 = vld [vmem:[#allocation3 + $0x38] sm:$0xff]
        %v613 = vld [vmem:[#allocation3 + $0x40] sm:$0xff]
        %v614 = vld [vmem:[#allocation3 + $0x48] sm:$0xff]
        %v615 = vld [vmem:[#allocation3 + $0x50] sm:$0xff]
        %v616 = vld [vmem:[#allocation3 + $0x58] sm:$0xff]
        %v617 = vld [vmem:[#allocation3 + $0x60] sm:$0xff]
        %vm618 = vcmask 850944
        %v620 = vsel %vm618, %v603, 0
        %v623 = vsel %vm618, %v604, 0
        %625 = vmatprep.subr.mxu0 0.0
        %626 = vmatpush1.msra.mxu0 %v605
        %627 = vmatprep.subr.mxu0 0.0
        %628 = vmatpush1.msra.mxu0 %v606
        %629 = vmatprep.subr.mxu0 0.0
        %630 = vmatpush1.msra.mxu0 %v607
        %631 = vmatprep.subr.mxu0 0.0
        %632 = vmatpush1.msra.mxu0 %v608
        %633 = vmatprep.subr.mxu0 0.0
        %634 = vmatpush1.msra.mxu0 %v609
        %635 = vmatprep.subr.mxu0 0.0
        %636 = vmatpush1.msra.mxu0 %v610
        %637 = vmatprep.subr.mxu0 0.0
        %638 = vmatpush1.msra.mxu0 %v611
        %639 = vmatprep.subr.mxu0 0.0
        %640 = vmatpush1.msra.mxu0 %v612
        %641 = vmatprep.subr.mxu0 0.0
        %642 = vmatpush1.msra.mxu0 %v613
        %643 = vmatprep.subr.mxu0 0.0
        %644 = vmatpush1.msra.mxu0 %v614
        %645 = vmatprep.subr.mxu0 0.0
        %646 = vmatpush1.msra.mxu0 %v615
        %647 = vmatprep.subr.mxu0 0.0
        %648 = vmatpush1.msra.mxu0 %v616
        %649 = vmatprep.subr.mxu0 0.0
        %650 = vmatpush1.msra.mxu0 %v617
        %651 = vmatprep.subr.mxu0 0.0
        %652 = vmatpush1.msra.mxu0 0.0
        %653 = vmatprep.subr.mxu0 0.0
        %654 = vmatpush1.msra.mxu0 0.0
        %655 = vmatprep.subr.mxu0 0.0
        %656 = vmatpush1.msra.mxu0 0.0
        %657 = vmatprep.subr.mxu0 0.0
        %658 = vmatpush1.msra.mxu0 0.0
        %659 = vmatprep.subr.mxu0 0.0
        %660 = vmatpush1.msra.mxu0 0.0
        %661 = vmatprep.subr.mxu0 0.0
        %662 = vmatpush1.msra.mxu0 0.0
        %663 = vmatprep.subr.mxu0 0.0
        %664 = vmatpush1.msra.mxu0 0.0
        %665 = vmatprep.subr.mxu0 0.0
        %666 = vmatpush1.msra.mxu0 0.0
        %667 = vmatprep.subr.mxu0 0.0
        %668 = vmatpush1.msra.mxu0 0.0
        %669 = vmatprep.subr.mxu0 0.0
        %670 = vmatpush1.msra.mxu0 0.0
        %671 = vmatprep.subr.mxu0 0.0
        %672 = vmatpush1.msra.mxu0 0.0
        %673 = vmatprep.subr.mxu0 0.0
        %674 = vmatpush1.msra.mxu0 0.0
        %675 = vmatprep.subr.mxu0 0.0
        %676 = vmatpush1.msra.mxu0 0.0
        %677 = vmatprep.subr.mxu0 0.0
        %678 = vmatpush1.msra.mxu0 0.0
        %679 = vmatprep.subr.mxu0 0.0
        %680 = vmatpush1.msra.mxu0 0.0
        %681 = vmatprep.subr.mxu0 0.0
        %682 = vmatpush1.msra.mxu0 0.0
        %683 = vmatprep.subr.mxu0 0.0
        %684 = vmatpush1.msra.mxu0 0.0
        %685 = vmatprep.subr.mxu0 0.0
        %686 = vmatpush1.msra.mxu0 0.0
        %687 = vmatprep.subr.mxu0 0.0
        %688 = vmatpush1.msra.mxu0 0.0
        %689 = vmatprep.mubr.f32.mxu0 0.0
        %690 = vmatmul.mubr.f32.gmra.mrb[0].mxu0 %v620
        %v691 = vpop.f32.mrb[0].mxu0
        %v692 = vadd.f32 0.0, %v691
        %v693 = vpop.f32.mrb[0].mxu0
        %694 = vmatprep.mubr.f32.mxu0 0.0
        %695 = vmatmul.mubr.f32.gmra.mrb[0].mxu0 %v623
        %v696 = vpop.f32.mrb[0].mxu0
        %v697 = vadd.f32 0.0, %v696
        %v698 = vpop.f32.mrb[0].mxu0
        %699 = vdwg.mxu0
        %700 = vst [vmem:[%s238] sm:$0xff] %v692
        %701 = vst [vmem:[%s238 + $0x8] sm:$0xff] %v697
        %s702 = sand.u32 %s156, 1
        %s703 = sand.u32 %s156, 1
        %s704 = smul.addr %s703, 16
        %s705 = scalar_lea.vmem [#allocation4], %s704
        // Predicated region
        $region45: #{_affine_net2d_call.1} parent=43 // pred_check
          %p706 = pneg %p166
        $region46: #{_affine_net2d_call.1} parent=43 // pred_check_branch
          %708 = sbr.rel (%p706) target = $region48
        $region47: #{_affine_net2d_call.1} parent=43 // pred_region
          %s709 = smul.addr %s17, 8
          %s710 = scalar_lea.vmem %s6, %s709
          // Predicated region
          $region49: #{_affine_net2d_call.1} parent=47 // pred_check
            _
          $region50: #{_affine_net2d_call.1} parent=47 // pred_check_branch
            %712 = sbr.rel (0) target = $region52
          $region51: #{_affine_net2d_call.1} parent=47 // pred_region
            // Predicated region
            $region53: #{_affine_net2d_call.1} parent=51 // pred_check
              _
            $region54: #{_affine_net2d_call.1} parent=51 // pred_check_branch
              %714 = sbr.rel (0) target = $region56
            $region55: #{_affine_net2d_call.1} parent=51 // pred_region
              // Predicated region
              $region68: #{_affine_net2d_call.1} parent=55 // pred_check
                _
              $region69: #{_affine_net2d_call.1} parent=55 // pred_check_branch
                %731 = sbr.rel (0) target = $region71
              $region70: #{_affine_net2d_call.1} parent=55 // pred_region
                loop: start=0, step=1, limit=1
                $region72: #{_affine_net2d_call.1} parent=70 // loop_pre_header
                  _
                $region73: #{_affine_net2d_call.1} parent=70 // loop_header
                  %s733 = sphi 0, %s737
                  %p734 = scmp.ge.s32.totalorder %s733, 1
                  %s738 = sphi %s705, %s705
                  %s739 = sphi %s710, %s710
                $region74: #{_affine_net2d_call.1} parent=70 // loop_header_branch
                  %736 = sbr.rel (%p734) target = $region78
                $region75: #{_affine_net2d_call.1} parent=70 // loop_body
                  %v740 = vld [vmem:[%s738] sm:$0xff]
                  %741 = vst [vmem:[%s739] sm:$0xff] %v740
                  %v742 = vld [vmem:[%s738 + $0x8] sm:$0xff]
                  %743 = vst [vmem:[%s739 + $0x10] sm:$0xff] %v742
                $region76: #{_affine_net2d_call.1} parent=70 // loop_footer
                  %s737 = sadd.s32 1, %s733
                $region77: #{_affine_net2d_call.1} parent=70 // loop_footer_branch
                  %732 = sbr.rel target = $region73
                $region78: #{_affine_net2d_call.1} parent=70 // loop_exit
                  _
              $region71: #{_affine_net2d_call.1} parent=55 // pred_fallthru
                _
              // Predicated region
              $region79: #{_affine_net2d_call.1} parent=55 // pred_check
                _
              $region80: #{_affine_net2d_call.1} parent=55 // pred_check_branch
                %745 = sbr.rel target = $region82
              $region81: #{_affine_net2d_call.1} parent=55 // pred_region
                _
              $region82: #{_affine_net2d_call.1} parent=55 // pred_fallthru
                _
            $region56: #{_affine_net2d_call.1} parent=51 // pred_fallthru
              _
            // Predicated region
            $region57: #{_affine_net2d_call.1} parent=51 // pred_check
              _
            $region58: #{_affine_net2d_call.1} parent=51 // pred_check_branch
              %716 = sbr.rel target = $region60
            $region59: #{_affine_net2d_call.1} parent=51 // pred_region
              loop: start=0, step=1, limit=1
              $region61: #{_affine_net2d_call.1} parent=59 // loop_pre_header
                _
              $region62: #{_affine_net2d_call.1} parent=59 // loop_header
                %s719 = sphi 0, %s723
                %p720 = scmp.ge.s32.totalorder %s719, 1
                %s724 = sphi %s705, %s705
                %s725 = sphi %s710, %s710
              $region63: #{_affine_net2d_call.1} parent=59 // loop_header_branch
                %722 = sbr.rel (%p720) target = $region67
              $region64: #{_affine_net2d_call.1} parent=59 // loop_body
                %v726 = vld [vmem:[%s724] sm:$0xff]
                %727 = vst [vmem:[%s725] sm:$0xff] %v726
                %v728 = vld [vmem:[%s724 + $0x8] sm:$0xff]
                %729 = vst [vmem:[%s725 + $0x10] sm:$0xff] %v728
              $region65: #{_affine_net2d_call.1} parent=59 // loop_footer
                %s723 = sadd.s32 1, %s719
              $region66: #{_affine_net2d_call.1} parent=59 // loop_footer_branch
                %718 = sbr.rel target = $region62
              $region67: #{_affine_net2d_call.1} parent=59 // loop_exit
                _
            $region60: #{_affine_net2d_call.1} parent=51 // pred_fallthru
              _
          $region52: #{_affine_net2d_call.1} parent=47 // pred_fallthru
            _
          %746 = vnop
        $region48: #{_affine_net2d_call.1} parent=43 // pred_fallthru
          _
      $region44: #{_affine_net2d_call.1} parent=5 // pred_fallthru
        _
      %p747 = scmp.le.s32.totalorder 2, %s12
      // Predicated region
      $region83: #{_affine_net2d_call.1} parent=5 // pred_check
        %p748 = pneg %p747
      $region84: #{_affine_net2d_call.1} parent=5 // pred_check_branch
        %750 = sbr.rel (%p748) target = $region86
      $region85: #{_affine_net2d_call.1} parent=5 // pred_region
        %s751 = ssub.s32 %s12, 2
        // Predicated region
        $region87: #{_affine_net2d_call.1} parent=85 // pred_check
          %p752 = pneg %p172
        $region88: #{_affine_net2d_call.1} parent=85 // pred_check_branch
          %754 = sbr.rel (%p752) target = $region90
        $region89: #{_affine_net2d_call.1} parent=85 // pred_region
          %s755 = sand.u32 %s157, 1
          %s756 = sand.u32 %s157, 1
          %s757 = smul.addr %s756, 16
          %s758 = scalar_lea.vmem [#allocation4], %s757
        $region90: #{_affine_net2d_call.1} parent=85 // pred_fallthru
          _
      $region86: #{_affine_net2d_call.1} parent=5 // pred_fallthru
        _
    $region6: #{_affine_net2d_call.1} parent=1 // loop_footer
      %s16 = sadd.s32 1, %s12
    $region7: #{_affine_net2d_call.1} parent=1 // loop_footer_branch
      %11 = sbr.rel target = $region3
    $region8: #{_affine_net2d_call.1} parent=1 // loop_exit
      _

</llo_original>
